<compile_context>
chip_gen: v5e
topology: v5e:2x2
jax: 0.10.0
libtpu: 0.0.40
codegen_flags: <defaults>
</compile_context>

<pallas_src>
import jax
import jax.numpy as jnp
from jax.experimental import pallas as pl
from jax.experimental.pallas import tpu as pltpu


def _droppath_kernel(scale_ref, x_ref, o_ref):
    # scale_ref: (BN, 1) f32 column of per-sample scales (0 or 1/keep_prob).
    # x_ref/o_ref: (BN, BL) tiles. Broadcast-multiply in f32, cast at the end.
    o_ref[...] = (x_ref[...].astype(jnp.float32) * scale_ref[...]).astype(o_ref.dtype)


def drop_path(x: jax.Array, key: jax.Array, drop_prob: float = 0.0) -> jax.Array:
    """DropPath forward. x: (N, C, H, W) (or any (N, ...) shape)."""
    if drop_prob <= 0.0:
        return x
    keep_prob = 1.0 - drop_prob

    orig_shape = x.shape
    n = x.shape[0]

    # Per-sample scale: 0 or 1/keep_prob, computed host-side in f32.
    keep = jax.random.bernoulli(key, p=keep_prob, shape=(n,))
    scale = keep.astype(jnp.float32) / jnp.float32(keep_prob)  # (n,)

    # Flatten to lane-dense (N, L).
    x2 = x.reshape(n, -1)
    l = x2.shape[1]

    # Tile sizes: batch -> sublanes, features -> lanes.
    bn = 8 if n >= 8 else n                       # sublane block
    l_128 = ((l + 127) // 128) * 128              # lane-dim multiple of 128
    bl = min(8192, l_128)                         # <= 256 KiB f32 per buffer

    n_pad = ((n + bn - 1) // bn) * bn
    l_pad = ((l_128 + bl - 1) // bl) * bl

    if (n_pad, l_pad) != (n, l):
        x2 = jnp.pad(x2, ((0, n_pad - n), (0, l_pad - l)))
    scale_col = jnp.pad(scale, (0, n_pad - n)).reshape(n_pad, 1)

    grid = (n_pad // bn, l_pad // bl)

    out = pl.pallas_call(
        _droppath_kernel,
        out_shape=jax.ShapeDtypeStruct((n_pad, l_pad), x.dtype),
        grid=grid,
        in_specs=[
            pl.BlockSpec((bn, 1), lambda i, j: (i, 0)),
            pl.BlockSpec((bn, bl), lambda i, j: (i, j)),
        ],
        out_specs=pl.BlockSpec((bn, bl), lambda i, j: (i, j)),
        compiler_params=pltpu.CompilerParams(
            dimension_semantics=("parallel", "parallel"),
        ),
        cost_estimate=pl.CostEstimate(
            flops=int(x.size),
            transcendentals=0,
            bytes_accessed=int(2 * x.size * x.dtype.itemsize),
        ),
    )(scale_col, x2)

    return out[:n, :l].reshape(orig_shape)


if __name__ == "__main__":
    key = jax.random.PRNGKey(0)
    x_key, mask_key = jax.random.split(key)
    x = jax.random.normal(x_key, (2, 4, 16, 16), dtype=jnp.float32)

    # drop_prob > 0 path (the interesting one).
    drop_prob = 0.2
    keep_prob = 1.0 - drop_prob
    y = drop_path(x, mask_key, drop_prob=drop_prob)
    y = jax.block_until_ready(y)

    # Reference built from the same Bernoulli draw (host-side, deterministic).
    keep_ref = jax.random.bernoulli(mask_key, p=keep_prob, shape=(x.shape[0],))
    scale_ref = keep_ref.astype(jnp.float32) / keep_prob
    y_ref = x * scale_ref[:, None, None, None]
    assert bool(jnp.allclose(y, y_ref, rtol=1e-6, atol=1e-6)), "mismatch vs reference"

    # Per-sample semantics: each batch element is exactly 0 or x / keep_prob.
    for b in range(x.shape[0]):
        yb, xb = y[b], x[b]
        is_dropped = bool(jnp.allclose(yb, 0.0))
        is_kept = bool(jnp.allclose(yb, xb / keep_prob, rtol=1e-5, atol=1e-5))
        assert is_dropped or is_kept, "per-sample mask semantics violated"

    # drop_prob == 0 path is identity.
    y0 = jax.block_until_ready(drop_path(x, mask_key, drop_prob=0.0))
    assert bool(jnp.array_equal(y0, x))

    print("KERNEL_OK")
</pallas_src>

<mosaic_0001>
module attributes {stable_mosaic.version = 11 : i64} {
  func.func @_droppath_kernel(%arg0: i32, %arg1: i32, %arg2: memref<2x1xf32, #tpu.memory_space<vmem>>, %arg3: memref<2x1024xf32, #tpu.memory_space<vmem>>, %arg4: memref<2x1024xf32, #tpu.memory_space<vmem>>) attributes {dimension_semantics = [#tpu.dimension_semantics<parallel>, #tpu.dimension_semantics<parallel>], iteration_bounds = array<i64: 1, 1>, scalar_prefetch = 0 : i64, scratch_operands = 0 : i64, tpu.core_type = #tpu.core_type<tc>, window_params = [{transform_indices = @transform_0, window_bounds = array<i64: 2, 1>}, {transform_indices = @transform_1, window_bounds = array<i64: 2, 1024>}, {transform_indices = @transform_2, window_bounds = array<i64: 2, 1024>}]} {
    %c0 = arith.constant 0 : index
    %c0_0 = arith.constant 0 : index
    %0 = vector.load %arg3[%c0, %c0_0] : memref<2x1024xf32, #tpu.memory_space<vmem>>, vector<2x1024xf32>
    %c0_1 = arith.constant 0 : index
    %c0_2 = arith.constant 0 : index
    %1 = vector.load %arg2[%c0_1, %c0_2] : memref<2x1xf32, #tpu.memory_space<vmem>>, vector<2x1xf32>
    %2 = vector.broadcast %1 : vector<2x1xf32> to vector<2x1024xf32>
    %3 = arith.mulf %0, %2 : vector<2x1024xf32>
    %c0_3 = arith.constant 0 : index
    %c0_4 = arith.constant 0 : index
    %4 = vector.load %arg4[%c0_3, %c0_4] : memref<2x1024xf32, #tpu.memory_space<vmem>>, vector<2x1024xf32>
    tpu.vector_store %arg4[%c0_3, %c0_4], %3 {strides = array<i32>} : memref<2x1024xf32, #tpu.memory_space<vmem>>, vector<2x1024xf32>,
    return
  }
  func.func @transform_0(%arg0: i32, %arg1: i32) -> (i32, i32) {
    %c0_i32 = arith.constant 0 : i32
    %c0_i32_0 = arith.constant 0 : i32
    return %arg0, %c0_i32 : i32, i32
  }
  func.func @transform_1(%arg0: i32, %arg1: i32) -> (i32, i32) {
    %c0_i32 = arith.constant 0 : i32
    return %arg0, %arg1 : i32, i32
  }
  func.func @transform_2(%arg0: i32, %arg1: i32) -> (i32, i32) {
    %c0_i32 = arith.constant 0 : i32
    return %arg0, %arg1 : i32, i32
  }
}

</mosaic_0001>

<llo_original>
// kernel: tpu_custom_call.1
$region0: #{tpu_custom_call.1}
  #allocation0 [shape = 'u32[]', space=smem, size = 0x4, offset = 0x4, fixed_abs, tag = 'smem constant byte address 0x4 - core index']
  #allocation1 [shape = 'u32[72,128]{1,0:T(1,128)}', space=vmem, size = 0x9000, scoped, tag = 'internal scratch']
  %s0 = inlined_call_operand.vmem [shape: f32[2,1], index: 0, kind: input, shape index: {}]
  %s1 = inlined_call_operand.hbm [shape: f32[2,1024], index: 1, kind: input, shape index: {}]
  %s2 = inlined_call_operand.hbm [shape: f32[2,1024], index: 2, kind: output, shape index: {}]
  %s3 = sld [smem:[#allocation0]]
  $region22: #{tpu_custom_call.1} parent=0
    _
  %s5 = ssub.s32 1, %s3
  %s6 = scalar_select 0, %s5, %s3
  $region1: #{tpu_custom_call.1} parent=0
    #allocation2 [shape = 'u8[8192]{0}', space=vmem, size = 0x2000, scoped, tag = 'input window, operand 1, single buffered']
    #allocation3 [shape = 's32[1]{0}', space=sflag, size = 0x4, scoped, tag = 'scoped memory for tpu_custom_call.1']
    #allocation4 [shape = 's32[1]{0}', space=sflag, size = 0x4, scoped, tag = 'scoped memory for tpu_custom_call.1']
    #allocation5 [shape = 'u8[8192]{0}', space=vmem, size = 0x2000, scoped, tag = 'output window, operand 0, single buffered']
    %7 = vsyncpa [#allocation3], 0
    %8 = vsyncpa [#allocation4], 0
    // Predicated region
    $region2: #{tpu_custom_call.1} parent=1 // pred_check
      _
    $region3: #{tpu_custom_call.1} parent=1 // pred_check_branch
      %10 = sbr.rel (0) target = $region5
    $region4: #{tpu_custom_call.1} parent=1 // pred_region
      _
    $region5: #{tpu_custom_call.1} parent=1 // pred_fallthru
      _
    // Predicated region
    $region6: #{tpu_custom_call.1} parent=1 // pred_check
      _
    $region7: #{tpu_custom_call.1} parent=1 // pred_check_branch
      %12 = sbr.rel (0) target = $region9
    $region8: #{tpu_custom_call.1} parent=1 // pred_region
      %14 = vsyncadd [#allocation3], 0
      %s16 = sshll.u32 %s1, 4
      %s17 = int_to_ptr.hbm [resolvable:$true] %s16
      %s18 = sshll.u32 [#allocation2], 4
      %s19 = int_to_ptr.vmem [resolvable:$true] %s18
      %21 = dma.hbm_to_vmem [thread:$0]  %s17, 256, %s19, [#allocation3]
    $region9: #{tpu_custom_call.1} parent=1 // pred_fallthru
      _
    // Predicated region
    $region10: #{tpu_custom_call.1} parent=1 // pred_check
      _
    $region11: #{tpu_custom_call.1} parent=1 // pred_check_branch
      %23 = sbr.rel (0) target = $region13
    $region12: #{tpu_custom_call.1} parent=1 // pred_region
      %25 = dma.done [#allocation3], 256
    $region13: #{tpu_custom_call.1} parent=1 // pred_fallthru
      _
    %v26 = vld [vmem:[#allocation2] sm:$0xff]
    %v27 = vld [vmem:[#allocation2 + $0x8] sm:$0xff]
    %v28 = vld [vmem:[%s0] sm:$0x3]
    %30 = vset.pattern.permute.xlu0 0
    %31 = vperm.xlu0 %30, %v28
    %v32 = vpop.permute.xlu0 %31
    %v34 = vunpack.c.l.s4 269488144
    %v35 = vunpack.c.0.s8 %v34
    %v36 = vperm.slane %v32, %v35
    %v38 = vmul.f32 %v26, %v36
    %v39 = vmul.f32 %v27, %v36
    %40 = vst [vmem:[#allocation5] sm:$0xff] %v38
    %41 = vst [vmem:[#allocation5 + $0x8] sm:$0xff] %v39
    // Predicated region
    $region14: #{tpu_custom_call.1} parent=1 // pred_check
      _
    $region15: #{tpu_custom_call.1} parent=1 // pred_check_branch
      %43 = sbr.rel (0) target = $region17
    $region16: #{tpu_custom_call.1} parent=1 // pred_region
      %45 = vsyncadd [#allocation4], 0
      %s47 = sshll.u32 [#allocation5], 4
      %s48 = int_to_ptr.vmem [resolvable:$true] %s47
      %s49 = sshll.u32 %s2, 4
      %s50 = int_to_ptr.hbm [resolvable:$true] %s49
      %52 = dma.vmem_to_hbm [thread:$0]  %s48, 256, %s50, [#allocation4]
    $region17: #{tpu_custom_call.1} parent=1 // pred_fallthru
      _
    // Predicated region
    $region18: #{tpu_custom_call.1} parent=1 // pred_check
      _
    $region19: #{tpu_custom_call.1} parent=1 // pred_check_branch
      %54 = sbr.rel (0) target = $region21
    $region20: #{tpu_custom_call.1} parent=1 // pred_region
      %56 = dma.done [#allocation4], 256
    $region21: #{tpu_custom_call.1} parent=1 // pred_fallthru
      _
    %57 = vsyncpa [#allocation3], 1
    %58 = vsyncpa [#allocation4], 1

</llo_original>
